<compile_context>
chip_gen: v5e
topology: v5e:2x2
jax: 0.10.0
libtpu: 0.0.40
codegen_flags: <defaults>
</compile_context>

<pallas_src>
import jax
import jax.numpy as jnp
import numpy as np
from jax.experimental import pallas as pl
from jax.experimental.pallas import tpu as pltpu

_MASK_FILL = -1e30   # finite sentinel: avoids NaN if an entire row is masked
_PACK = 128          # lane-padded packed output width (>= D + S)


# ----------------------------------------------------------------------------- kernel
def attention_core_kernel(wq_ref, uhb_ref, enc_ref, mask_bias_ref, w_v_ref, out_ref):
    """Per T-block attention core.

    wq_ref:        (Tb, B, D)  pre-projected queries for this block (bias folded into uh_b)
    uhb_ref:       (B, S, D)   enc_hs @ W_ctx^T + b_q  (resident, computed once per encoder)
    enc_ref:       (B, S, D)   encoder hidden states   (resident)
    mask_bias_ref: (B, S)      additive mask bias (-1e30 on masked positions) + b_v
    w_v_ref:       (1, D)      scoring vector v
    out_ref:       (Tb, B, 128) packed [ctx | attn | 0-pad] slab (single lane-dense store)
    """
    Tb, B, D = wq_ref.shape
    S = enc_ref.shape[1]

    # tanh(wq + uh): wq broadcast over source positions S, uh_b broadcast over the Tb steps.
    wq = wq_ref[...]                                                    # (Tb, B, D)
    wquh = jnp.tanh(wq[:, :, None, :] + uhb_ref[...][None, :, :, :])    # (Tb, B, S, D)

    # scores = v(wquh): N=1 MXU matmul is degenerate -> VPU multiply + lane reduce.
    wv = w_v_ref[...]                                                   # (1, D)
    scores = jnp.sum(wquh * wv[None, None, :, :], axis=-1)              # (Tb, B, S)

    # masked_fill + v-bias folded into one additive term from the wrapper, then softmax(-1).
    masked = scores + mask_bias_ref[...][None, :, :]                    # (Tb, B, S)
    m = jnp.max(masked, axis=-1, keepdims=True)
    e = jnp.exp(masked - m)
    attn = e / jnp.sum(e, axis=-1, keepdims=True)                       # (Tb, B, S)

    # ctx = bmm(attn, enc_hs): VPU multiply + sublane reduce over S.
    # (MXU offload of this contraction only pays off once S, D >= 128.)
    ctx = jnp.sum(attn[:, :, :, None] * enc_ref[...][None, :, :, :], axis=2)   # (Tb, B, D)

    # One dense 128-lane store instead of three masked partial stores.
    pad_w = out_ref.shape[-1] - D - S
    parts = [ctx, attn]
    if pad_w:
        parts.append(jnp.zeros((Tb, B, pad_w), jnp.float32))
    out_ref[...] = jnp.concatenate(parts, axis=-1)


# ----------------------------------------------------------------------------- wrappers
def attention_batched(s_prev_steps, enc_hs, src_mask, w_ctx, w_q, b_q, w_v, b_v,
                      *, t_block=4):
    """T independent decoder queries against one encoder, in a single pallas_call.

    s_prev_steps: (T, B, D).  Returns ctx (T, B, D), attn (T, B, S).
    """
    T, B, D = s_prev_steps.shape
    S = enc_hs.shape[1]
    assert b_q.shape == (1, D) and w_v.shape == (1, D) and b_v.shape == (1, 1)
    # TODO(synk): beyond toy shapes, replace the single packed slab with two lane-dense
    # outputs whose widths are multiples of 128.
    assert D + S <= _PACK

    # --- hoisted GEMMs (plain XLA; once per encoder pass / once per step batch) --------
    # uh_b = enc_hs @ W_ctx^T + b_q   (b_q folded here so the step kernel never sees it)
    uhb = jnp.einsum('bsd,ed->bse', enc_hs, w_ctx) + b_q                # (B, S, D)
    # wq  = s_prev @ W_q^T : one (T*B, D) @ (D, D) GEMM instead of T degenerate M=B ones.
    wq_all = jnp.einsum('tbd,ed->tbe', s_prev_steps, w_q)               # (T, B, D)

    # masked_fill(-inf) replaced by a finite additive bias with the v-bias folded in.
    mask_bias = (jnp.where(src_mask != 0,
                           jnp.float32(_MASK_FILL), jnp.float32(0.0))
                 + b_v[0, 0])                                           # (B, S)

    # --- block the steps axis -----------------------------------------------------------
    Tb = max(1, min(t_block, T))
    n_blk = -(-T // Tb)
    T_pad = n_blk * Tb
    if T_pad != T:
        wq_all = jnp.concatenate(
            [wq_all, jnp.zeros((T_pad - T, B, D), jnp.float32)], axis=0)

    packed = pl.pallas_call(
        attention_core_kernel,
        out_shape=jax.ShapeDtypeStruct((T_pad, B, _PACK), jnp.float32),
        grid=(n_blk,),
        in_specs=[
            pl.BlockSpec((Tb, B, D), lambda t: (t, 0, 0)),   # this block of projected queries
            pl.BlockSpec((B, S, D), lambda t: (0, 0, 0)),    # uh_b (resident)
            pl.BlockSpec((B, S, D), lambda t: (0, 0, 0)),    # enc_hs (resident)
            pl.BlockSpec((B, S), lambda t: (0, 0)),          # additive mask bias (resident)
            pl.BlockSpec((1, D), lambda t: (0, 0)),          # v weight row (resident)
        ],
        out_specs=pl.BlockSpec((Tb, B, _PACK), lambda t: (t, 0, 0)),
        compiler_params=pltpu.CompilerParams(
            dimension_semantics=("parallel",),               # T-blocks are independent
            vmem_limit_bytes=32 * 1024 * 1024,
        ),
    )(wq_all, uhb, enc_hs, mask_bias, w_v)

    packed = packed[:T]
    return packed[:, :, :D], packed[:, :, D:D + S]


def attention(s_prev, enc_hs, src_mask, w_ctx, w_q, b_q, w_v, b_v):
    """Module-equivalent forward: s_prev (B, 1, D) -> (ctx (B, D), attn (B, S))."""
    B, _, D = s_prev.shape
    ctx, attn = attention_batched(s_prev.reshape(1, B, D), enc_hs, src_mask,
                                  w_ctx, w_q, b_q, w_v, b_v)
    return ctx[0], attn[0]


def attention_ref(s_prev, enc_hs, src_mask, w_ctx, w_q, b_q, w_v, b_v):
    """Pure-JAX reference mirroring the PyTorch forward."""
    uh = jnp.einsum('bsd,ed->bse', enc_hs, w_ctx)
    wq = jnp.einsum('bod,ed->boe', s_prev, w_q) + b_q                  # (B, 1, D)
    wquh = jnp.tanh(wq + uh)
    scores = (jnp.einsum('bsd,od->bso', wquh, w_v) + b_v).squeeze(-1)  # (B, S)
    masked = jnp.where(src_mask != 0, -jnp.inf, scores)
    attn = jax.nn.softmax(masked, axis=-1)
    ctx = jnp.einsum('bs,bsd->bd', attn, enc_hs)
    return ctx, attn


if __name__ == "__main__":
    B, S, D = 2, 8, 32
    key = jax.random.PRNGKey(0)
    k1, k2, k3, k4, k5, k6, k7, k8 = jax.random.split(key, 8)

    # nn.Linear conventions: out = x @ W.T + b
    scale = 1.0 / np.sqrt(D)
    w_ctx = jax.random.uniform(k1, (D, D), jnp.float32, -scale, scale)   # linear_ctx.weight
    w_q = jax.random.uniform(k2, (D, D), jnp.float32, -scale, scale)     # linear_query.weight
    b_q = jax.random.uniform(k3, (1, D), jnp.float32, -scale, scale)     # linear_query.bias
    w_v = jax.random.uniform(k4, (1, D), jnp.float32, -scale, scale)     # v.weight
    b_v = jax.random.uniform(k5, (1, 1), jnp.float32, -scale, scale)     # v.bias

    s_prev = jax.random.normal(k6, (B, 1, D), jnp.float32)
    enc_hs = jax.random.normal(k7, (B, S, D), jnp.float32)
    # Mask out the last two source positions of every batch element (nonzero == masked).
    src_mask = jnp.zeros((B, S), jnp.int32).at[:, -2:].set(1)

    # --- module-equivalent single-step forward ---------------------------------------
    ctx, attn = attention(s_prev, enc_hs, src_mask, w_ctx, w_q, b_q, w_v, b_v)
    jax.block_until_ready((ctx, attn))

    ctx_r, attn_r = attention_ref(s_prev, enc_hs, src_mask, w_ctx, w_q, b_q, w_v, b_v)
    np.testing.assert_allclose(np.asarray(ctx), np.asarray(ctx_r), rtol=1e-5, atol=1e-5)
    np.testing.assert_allclose(np.asarray(attn), np.asarray(attn_r), rtol=1e-5, atol=1e-5)
    assert ctx.shape == (B, D) and attn.shape == (B, S)

    # --- batched-steps path: T=6 queries, t_block=4 -> 2 grid blocks (one padded tail), --
    # --- projections hoisted to two GEMMs, one pallas_call for all steps.               --
    T = 6
    s_multi = jax.random.normal(k8, (T, B, D), jnp.float32)
    ctx_m, attn_m = attention_batched(s_multi, enc_hs, src_mask,
                                      w_ctx, w_q, b_q, w_v, b_v, t_block=4)
    jax.block_until_ready((ctx_m, attn_m))
    for t in range(T):
        ctx_rt, attn_rt = attention_ref(s_multi[t][:, None, :], enc_hs, src_mask,
                                        w_ctx, w_q, b_q, w_v, b_v)
        np.testing.assert_allclose(np.asarray(ctx_m[t]), np.asarray(ctx_rt),
                                   rtol=1e-5, atol=1e-5)
        np.testing.assert_allclose(np.asarray(attn_m[t]), np.asarray(attn_rt),
                                   rtol=1e-5, atol=1e-5)

    print("KERNEL_OK")
</pallas_src>

<mosaic_0001>
module attributes {stable_mosaic.version = 11 : i64} {
  func.func @attention_core_kernel(%arg0: i32, %arg1: memref<1x2x32xf32, #tpu.memory_space<vmem>>, %arg2: memref<2x8x32xf32, #tpu.memory_space<vmem>>, %arg3: memref<2x8x32xf32, #tpu.memory_space<vmem>>, %arg4: memref<2x8xf32, #tpu.memory_space<vmem>>, %arg5: memref<1x32xf32, #tpu.memory_space<vmem>>, %arg6: memref<1x2x128xf32, #tpu.memory_space<vmem>>) attributes {dimension_semantics = [#tpu.dimension_semantics<parallel>], iteration_bounds = array<i64: 1>, scalar_prefetch = 0 : i64, scratch_operands = 0 : i64, tpu.core_type = #tpu.core_type<tc>, window_params = [{transform_indices = @transform_0, window_bounds = array<i64: 1, 2, 32>}, {pipeline_mode = #tpu.pipeline_mode<synchronous>, transform_indices = @transform_1, window_bounds = array<i64: 2, 8, 32>}, {pipeline_mode = #tpu.pipeline_mode<synchronous>, transform_indices = @transform_2, window_bounds = array<i64: 2, 8, 32>}, {pipeline_mode = #tpu.pipeline_mode<synchronous>, transform_indices = @transform_3, window_bounds = array<i64: 2, 8>}, {pipeline_mode = #tpu.pipeline_mode<synchronous>, transform_indices = @transform_4, window_bounds = array<i64: 1, 32>}, {transform_indices = @transform_5, window_bounds = array<i64: 1, 2, 128>}]} {
    %c0 = arith.constant 0 : index
    %c0_0 = arith.constant 0 : index
    %c0_1 = arith.constant 0 : index
    %0 = vector.load %arg1[%c0, %c0_0, %c0_1] : memref<1x2x32xf32, #tpu.memory_space<vmem>>, vector<1x2x32xf32>
    %1 = vector.shape_cast %0 : vector<1x2x32xf32> to vector<1x2x1x32xf32>
    %c0_2 = arith.constant 0 : index
    %c0_3 = arith.constant 0 : index
    %c0_4 = arith.constant 0 : index
    %2 = vector.load %arg2[%c0_2, %c0_3, %c0_4] : memref<2x8x32xf32, #tpu.memory_space<vmem>>, vector<2x8x32xf32>
    %3 = vector.shape_cast %2 : vector<2x8x32xf32> to vector<1x2x8x32xf32>
    %4 = vector.broadcast %1 : vector<1x2x1x32xf32> to vector<1x2x8x32xf32>
    %5 = arith.addf %4, %3 : vector<1x2x8x32xf32>
    %6 = math.tanh %5 : vector<1x2x8x32xf32>
    %c0_5 = arith.constant 0 : index
    %c0_6 = arith.constant 0 : index
    %7 = vector.load %arg5[%c0_5, %c0_6] : memref<1x32xf32, #tpu.memory_space<vmem>>, vector<1x32xf32>
    %8 = vector.shape_cast %7 : vector<1x32xf32> to vector<1x1x1x32xf32>
    %9 = vector.broadcast %8 : vector<1x1x1x32xf32> to vector<1x2x8x32xf32>
    %10 = arith.mulf %6, %9 : vector<1x2x8x32xf32>
    %cst = arith.constant dense<0.000000e+00> : vector<1x2x8xf32>
    %11 = vector.multi_reduction <add>, %10, %cst [3] : vector<1x2x8x32xf32> to vector<1x2x8xf32>
    %c0_7 = arith.constant 0 : index
    %c0_8 = arith.constant 0 : index
    %12 = vector.load %arg4[%c0_7, %c0_8] : memref<2x8xf32, #tpu.memory_space<vmem>>, vector<2x8xf32>
    %13 = vector.shape_cast %12 : vector<2x8xf32> to vector<1x2x8xf32>
    %14 = arith.addf %11, %13 : vector<1x2x8xf32>
    %cst_9 = arith.constant dense<0xFF800000> : vector<1x2xf32>
    %15 = vector.multi_reduction <maximumf>, %14, %cst_9 [2] : vector<1x2x8xf32> to vector<1x2xf32>
    %16 = vector.shape_cast %15 : vector<1x2xf32> to vector<1x2x1xf32>
    %17 = vector.broadcast %16 : vector<1x2x1xf32> to vector<1x2x8xf32>
    %18 = arith.subf %14, %17 : vector<1x2x8xf32>
    %19 = math.exp %18 : vector<1x2x8xf32>
    %cst_10 = arith.constant dense<0.000000e+00> : vector<1x2xf32>
    %20 = vector.multi_reduction <add>, %19, %cst_10 [2] : vector<1x2x8xf32> to vector<1x2xf32>
    %21 = vector.shape_cast %20 : vector<1x2xf32> to vector<1x2x1xf32>
    %22 = vector.broadcast %21 : vector<1x2x1xf32> to vector<1x2x8xf32>
    %23 = arith.divf %19, %22 : vector<1x2x8xf32>
    %24 = vector.shape_cast %23 : vector<1x2x8xf32> to vector<1x2x8x1xf32>
    %c0_11 = arith.constant 0 : index
    %c0_12 = arith.constant 0 : index
    %c0_13 = arith.constant 0 : index
    %25 = vector.load %arg3[%c0_11, %c0_12, %c0_13] : memref<2x8x32xf32, #tpu.memory_space<vmem>>, vector<2x8x32xf32>
    %26 = vector.shape_cast %25 : vector<2x8x32xf32> to vector<1x2x8x32xf32>
    %27 = vector.broadcast %24 : vector<1x2x8x1xf32> to vector<1x2x8x32xf32>
    %28 = arith.mulf %27, %26 : vector<1x2x8x32xf32>
    %cst_14 = arith.constant dense<0.000000e+00> : vector<1x2x32xf32>
    %29 = vector.multi_reduction <add>, %28, %cst_14 [2] : vector<1x2x8x32xf32> to vector<1x2x32xf32>
    %cst_15 = arith.constant 0.000000e+00 : f32
    %30 = vector.broadcast %cst_15 : f32 to vector<1x2x88xf32>
    %31 = tpu.concatenate %29, %23, %30 in 2 : vector<1x2x32xf32>, vector<1x2x8xf32>, vector<1x2x88xf32> -> vector<1x2x128xf32>
    %c0_16 = arith.constant 0 : index
    %c0_17 = arith.constant 0 : index
    %c0_18 = arith.constant 0 : index
    %32 = vector.load %arg6[%c0_16, %c0_17, %c0_18] : memref<1x2x128xf32, #tpu.memory_space<vmem>>, vector<1x2x128xf32>
    tpu.vector_store %arg6[%c0_16, %c0_17, %c0_18], %31 {strides = array<i32>} : memref<1x2x128xf32, #tpu.memory_space<vmem>>, vector<1x2x128xf32>,
    return
  }
  func.func @transform_0(%arg0: i32) -> (i32, i32, i32) {
    %c0_i32 = arith.constant 0 : i32
    %c0_i32_0 = arith.constant 0 : i32
    %c0_i32_1 = arith.constant 0 : i32
    return %arg0, %c0_i32, %c0_i32_0 : i32, i32, i32
  }
  func.func @transform_1(%arg0: i32) -> (i32, i32, i32) {
    %c0_i32 = arith.constant 0 : i32
    %c0_i32_0 = arith.constant 0 : i32
    %c0_i32_1 = arith.constant 0 : i32
    %c0_i32_2 = arith.constant 0 : i32
    return %c0_i32, %c0_i32_0, %c0_i32_1 : i32, i32, i32
  }
  func.func @transform_2(%arg0: i32) -> (i32, i32, i32) {
    %c0_i32 = arith.constant 0 : i32
    %c0_i32_0 = arith.constant 0 : i32
    %c0_i32_1 = arith.constant 0 : i32
    %c0_i32_2 = arith.constant 0 : i32
    return %c0_i32, %c0_i32_0, %c0_i32_1 : i32, i32, i32
  }
  func.func @transform_3(%arg0: i32) -> (i32, i32) {
    %c0_i32 = arith.constant 0 : i32
    %c0_i32_0 = arith.constant 0 : i32
    %c0_i32_1 = arith.constant 0 : i32
    return %c0_i32, %c0_i32_0 : i32, i32
  }
  func.func @transform_4(%arg0: i32) -> (i32, i32) {
    %c0_i32 = arith.constant 0 : i32
    %c0_i32_0 = arith.constant 0 : i32
    %c0_i32_1 = arith.constant 0 : i32
    return %c0_i32, %c0_i32_0 : i32, i32
  }
  func.func @transform_5(%arg0: i32) -> (i32, i32, i32) {
    %c0_i32 = arith.constant 0 : i32
    %c0_i32_0 = arith.constant 0 : i32
    %c0_i32_1 = arith.constant 0 : i32
    return %arg0, %c0_i32, %c0_i32_0 : i32, i32, i32
  }
}

</mosaic_0001>

<llo_original>
// kernel: tpu_custom_call.1
$region0: #{tpu_custom_call.1}
  #allocation0 [shape = 'u32[]', space=smem, size = 0x4, offset = 0x4, fixed_abs, tag = 'smem constant byte address 0x4 - core index']
  #allocation1 [shape = 'u32[72,128]{1,0:T(1,128)}', space=vmem, size = 0x9000, scoped, tag = 'internal scratch']
  %s0 = inlined_call_operand.hbm [shape: f32[1,2,32], index: 0, kind: input, shape index: {}]
  %s1 = inlined_call_operand.hbm [shape: f32[2,8,32], index: 1, kind: input, shape index: {}]
  %s2 = inlined_call_operand.hbm [shape: f32[2,8,32], index: 2, kind: input, shape index: {}]
  %s3 = inlined_call_operand.vmem [shape: f32[2,8], index: 3, kind: input, shape index: {}]
  %s4 = inlined_call_operand.vmem [shape: f32[1,32], index: 4, kind: input, shape index: {}]
  %s5 = inlined_call_operand.hbm [shape: f32[1,2,128], index: 5, kind: output, shape index: {}]
  %s6 = sld [smem:[#allocation0]]
  $region42: #{tpu_custom_call.1} parent=0
    _
  %s8 = ssub.s32 1, %s6
  %s9 = scalar_select 0, %s8, %s6
  $region1: #{tpu_custom_call.1} parent=0
    #allocation2 [shape = 'u8[1024]{0}', space=vmem, size = 0x400, scoped, tag = 'input window, operand 0, single buffered']
    #allocation3 [shape = 's32[1]{0}', space=sflag, size = 0x4, scoped, tag = 'scoped memory for tpu_custom_call.1']
    #allocation4 [shape = 's32[1]{0}', space=sflag, size = 0x4, scoped, tag = 'scoped memory for tpu_custom_call.1']
    #allocation5 [shape = 'u8[8192]{0}', space=vmem, size = 0x2000, scoped, tag = 'input window, operand 1, single buffered']
    #allocation6 [shape = 's32[1]{0}', space=sflag, size = 0x4, scoped, tag = 'scoped memory for tpu_custom_call.1']
    #allocation7 [shape = 'u8[8192]{0}', space=vmem, size = 0x2000, scoped, tag = 'input window, operand 2, single buffered']
    #allocation8 [shape = 'u8[1024]{0}', space=vmem, size = 0x400, scoped, tag = 'output window, operand 0, single buffered']
    %10 = vsyncpa [#allocation3], 0
    %11 = vsyncpa [#allocation6], 0
    %12 = vsyncpa [#allocation4], 0
    // Predicated region
    $region2: #{tpu_custom_call.1} parent=1 // pred_check
      _
    $region3: #{tpu_custom_call.1} parent=1 // pred_check_branch
      %14 = sbr.rel (0) target = $region5
    $region4: #{tpu_custom_call.1} parent=1 // pred_region
      %16 = vsyncadd [#allocation3], 0
      %s18 = sshll.u32 %s0, 4
      %s19 = int_to_ptr.hbm [resolvable:$true] %s18
      %s20 = sshll.u32 [#allocation2], 4
      %s21 = int_to_ptr.vmem [resolvable:$true] %s20
      %23 = dma.hbm_to_vmem [thread:$0]  %s19, 32, %s21, [#allocation3]
    $region5: #{tpu_custom_call.1} parent=1 // pred_fallthru
      _
    // Predicated region
    $region6: #{tpu_custom_call.1} parent=1 // pred_check
      _
    $region7: #{tpu_custom_call.1} parent=1 // pred_check_branch
      %25 = sbr.rel (0) target = $region9
    $region8: #{tpu_custom_call.1} parent=1 // pred_region
      %27 = vsyncadd [#allocation6], 0
      %s28 = sshll.u32 %s1, 4
      %s29 = int_to_ptr.hbm [resolvable:$true] %s28
      %s30 = sshll.u32 [#allocation5], 4
      %s31 = int_to_ptr.vmem [resolvable:$true] %s30
      %36 = dma.hbm_to_vmem [thread:$0]  %s29, 256, %s31, [#allocation6], 128, 128, 8
    $region9: #{tpu_custom_call.1} parent=1 // pred_fallthru
      _
    // Predicated region
    $region10: #{tpu_custom_call.1} parent=1 // pred_check
      _
    $region11: #{tpu_custom_call.1} parent=1 // pred_check_branch
      %38 = sbr.rel (0) target = $region13
    $region12: #{tpu_custom_call.1} parent=1 // pred_region
      %40 = vsyncadd [#allocation6], 0
      %s41 = sshll.u32 %s2, 4
      %s42 = int_to_ptr.hbm [resolvable:$true] %s41
      %s43 = sshll.u32 [#allocation7], 4
      %s44 = int_to_ptr.vmem [resolvable:$true] %s43
      %49 = dma.hbm_to_vmem [thread:$0]  %s42, 256, %s44, [#allocation6], 128, 128, 8
    $region13: #{tpu_custom_call.1} parent=1 // pred_fallthru
      _
    // Predicated region
    $region14: #{tpu_custom_call.1} parent=1 // pred_check
      _
    $region15: #{tpu_custom_call.1} parent=1 // pred_check_branch
      %51 = sbr.rel (0) target = $region17
    $region16: #{tpu_custom_call.1} parent=1 // pred_region
      _
    $region17: #{tpu_custom_call.1} parent=1 // pred_fallthru
      _
    // Predicated region
    $region18: #{tpu_custom_call.1} parent=1 // pred_check
      _
    $region19: #{tpu_custom_call.1} parent=1 // pred_check_branch
      %53 = sbr.rel (0) target = $region21
    $region20: #{tpu_custom_call.1} parent=1 // pred_region
      _
    $region21: #{tpu_custom_call.1} parent=1 // pred_fallthru
      _
    // Predicated region
    $region22: #{tpu_custom_call.1} parent=1 // pred_check
      _
    $region23: #{tpu_custom_call.1} parent=1 // pred_check_branch
      %55 = sbr.rel (0) target = $region25
    $region24: #{tpu_custom_call.1} parent=1 // pred_region
      %57 = dma.done [#allocation3], 32
    $region25: #{tpu_custom_call.1} parent=1 // pred_fallthru
      _
    // Predicated region
    $region26: #{tpu_custom_call.1} parent=1 // pred_check
      _
    $region27: #{tpu_custom_call.1} parent=1 // pred_check_branch
      %59 = sbr.rel (0) target = $region29
    $region28: #{tpu_custom_call.1} parent=1 // pred_region
      %61 = dma.done [#allocation6], 256
    $region29: #{tpu_custom_call.1} parent=1 // pred_fallthru
      _
    // Predicated region
    $region30: #{tpu_custom_call.1} parent=1 // pred_check
      _
    $region31: #{tpu_custom_call.1} parent=1 // pred_check_branch
      %63 = sbr.rel (0) target = $region33
    $region32: #{tpu_custom_call.1} parent=1 // pred_region
      %65 = dma.done [#allocation6], 256
    $region33: #{tpu_custom_call.1} parent=1 // pred_fallthru
      _
    %v66 = vld [vmem:[#allocation2] sm:$0x3]
    %v68 = vrot.slane %v66, 1
    %v69 = vld [vmem:[#allocation5] sm:$0xff]
    %v70 = vld [vmem:[#allocation5 + $0x8] sm:$0xff]
    %v71 = vperm.slane %v66, 0
    %v72 = vperm.slane %v68, 0
    %v75 = vadd.f32 %v71, %v69
    %v76 = vadd.f32 %v72, %v70
    %v77 = vtanh.pop %v75
    %v78 = vtanh.pop %v76
    %v79 = vld [vmem:[%s4] sm:$0x1]
    %v81 = vperm.slane %v79, 0
    %v83 = vmul.f32 %v77, %v81
    %v84 = vmul.f32 %v78, %v81
    %vm85 = vcmask 261120
    %v86 = vsel %vm85, %v83, 0.0
    %87 = vadd.xlane.f32.xlu0 %v86
    %v88 = vpop.xlane.xlu0 %87
    %v89 = vsel %vm85, %v84, 0.0
    %90 = vadd.xlane.f32.xlu0 %v89
    %v91 = vpop.xlane.xlu0 %90
    %v92 = vld [vmem:[%s3] sm:$0x3]
    %v94 = vperm.slane %v92, 0
    %v95 = vlaneseq
    %v96 = vshrl.u32 %v95, 7
    %98 = vset.pattern.permute.xlu0 %v96
    %99 = vperm.xlu0 %98, %v94
    %v100 = vpop.permute.xlu0 %99
    %v101 = vperm.slane %v92, 1
    %v102 = vlaneseq
    %v103 = vshrl.u32 %v102, 7
    %105 = vset.pattern.permute.xlu0 %v103
    %106 = vperm.xlu0 %105, %v101
    %v107 = vpop.permute.xlu0 %106
    %v110 = vadd.f32 %v88, %v100
    %v111 = vadd.f32 %v91, %v107
    %114 = vset.pattern.permute.xlu0 0
    %115 = vperm.xlu0 %114, %v110
    %v116 = vpop.permute.xlu0 %115
    %117 = vset.pattern.permute.xlu0 0
    %118 = vperm.xlu0 %117, %v111
    %v119 = vpop.permute.xlu0 %118
    %v120 = vlaneseq
    %v121 = vand.u32 %v120, 127
    %v122 = vperm.slane %v116, %v121
    %v123 = vperm.slane %v119, %v121
    %vm124 = vcmask 1041409
    %v125 = vsel %vm124, %v123, %v122
    %vm127 = vcmask 58368
    %v128 = vsel %vm127, %v125, -inf
    %129 = vmax.xlane.f32.xlu0 %v128
    %v130 = vpop.xlane.xlu0 %129
    %v132 = vperm.slane %v130, 0
    %v133 = vperm.slane %v130, 1
    %v136 = vsub.f32 %v110, %v132
    %v137 = vsub.f32 %v111, %v133
    %v138 = vmul.f32 %v136, 1.442695
    %v139 = vpow.pop %v138
    %v140 = vmul.f32 %v137, 1.442695
    %v141 = vpow.pop %v140
    %144 = vset.pattern.permute.xlu0 0
    %145 = vperm.xlu0 %144, %v139
    %v146 = vpop.permute.xlu0 %145
    %147 = vset.pattern.permute.xlu0 0
    %148 = vperm.xlu0 %147, %v141
    %v149 = vpop.permute.xlu0 %148
    %v150 = vperm.slane %v146, %v121
    %v151 = vperm.slane %v149, %v121
    %v152 = vsel %vm124, %v151, %v150
    %v154 = vsel %vm127, %v152, 0.0
    %155 = vadd.xlane.f32.xlu0 %v154
    %v156 = vpop.xlane.xlu0 %155
    %v158 = vperm.slane %v156, 0
    %v159 = vperm.slane %v156, 1
    %v162 = vrcp.pop %v158
    %v163 = vmul.f32 %v158, %v162
    %v164 = vsub.f32 1.0, %v163
    %v165 = vmul.f32 %v162, %v164
    %v166 = vadd.f32 %v162, %v165
    %vm167 = vweird.f32 %v158
    %vm168 = vweird.f32 %v162
    %vm169 = vmor %vm167, %vm168
    %v170 = vsel %vm169, %v162, %v166
    %v171 = vand.u32 2147483647, %v158
    %vm172 = vcmp.eq.f32.partialorder %v171, 8.507059e+37
    %v173 = vand.u32 %v158, 2147483648
    %v174 = vor.u32 1.1754944e-38, %v173
    %v175 = vsel %vm172, %v174, %v170
    %v176 = vmul.f32 %v139, %v175
    %v177 = vrcp.pop %v159
    %v178 = vmul.f32 %v159, %v177
    %v179 = vsub.f32 1.0, %v178
    %v180 = vmul.f32 %v177, %v179
    %v181 = vadd.f32 %v177, %v180
    %vm182 = vweird.f32 %v159
    %vm183 = vweird.f32 %v177
    %vm184 = vmor %vm182, %vm183
    %v185 = vsel %vm184, %v177, %v181
    %v186 = vand.u32 2147483647, %v159
    %vm187 = vcmp.eq.f32.partialorder %v186, 8.507059e+37
    %v188 = vand.u32 %v159, 2147483648
    %v189 = vor.u32 1.1754944e-38, %v188
    %v190 = vsel %vm187, %v189, %v185
    %v191 = vmul.f32 %v141, %v190
    %v192 = vld [vmem:[#allocation7] sm:$0xff]
    %v193 = vld [vmem:[#allocation7 + $0x8] sm:$0xff]
    %195 = vset.pattern.permute.xlu0 0
    %196 = vperm.xlu0 %195, %v176
    %v197 = vpop.permute.xlu0 %196
    %200 = vset.pattern.permute.xlu0 0
    %201 = vperm.xlu0 %200, %v191
    %v202 = vpop.permute.xlu0 %201
    %v204 = vmul.f32 %v197, %v192
    %v205 = vmul.f32 %v202, %v193
    %v206 = vsel %vm85, %v204, 0.0
    %v207 = vrot.slane %v206, 4
    %v208 = vadd.f32 %v206, %v207
    %v209 = vrot.slane %v208, 2
    %v210 = vadd.f32 %v208, %v209
    %v211 = vrot.slane %v210, 1
    %v212 = vadd.f32 %v210, %v211
    %v213 = vsel %vm85, %v205, 0.0
    %v214 = vrot.slane %v213, 4
    %v215 = vadd.f32 %v213, %v214
    %v216 = vrot.slane %v215, 2
    %v217 = vadd.f32 %v215, %v216
    %v218 = vrot.slane %v217, 1
    %v219 = vadd.f32 %v217, %v218
    %v222 = vsel %vm124, %v219, %v212
    %v224 = vadd.s32 %v121, 4294967264
    %v225 = vperm.slane %v197, %v224
    %v226 = vperm.slane %v202, %v224
    %v227 = vsel %vm124, %v226, %v225
    %v229 = vsel %vm85, %v222, %v227
    %vm230 = vcmask 326656
    %v231 = vsel %vm230, %v229, 0.0
    %232 = vst [vmem:[#allocation8] sm:$0x3] %v231
    // Predicated region
    $region34: #{tpu_custom_call.1} parent=1 // pred_check
      _
    $region35: #{tpu_custom_call.1} parent=1 // pred_check_branch
      %234 = sbr.rel (0) target = $region37
    $region36: #{tpu_custom_call.1} parent=1 // pred_region
      %236 = vsyncadd [#allocation4], 0
      %s238 = sshll.u32 [#allocation8], 4
      %s239 = int_to_ptr.vmem [resolvable:$true] %s238
      %s240 = sshll.u32 %s5, 4
      %s241 = int_to_ptr.hbm [resolvable:$true] %s240
      %243 = dma.vmem_to_hbm [thread:$0]  %s239, 32, %s241, [#allocation4]
    $region37: #{tpu_custom_call.1} parent=1 // pred_fallthru
      _
    // Predicated region
    $region38: #{tpu_custom_call.1} parent=1 // pred_check
      _
    $region39: #{tpu_custom_call.1} parent=1 // pred_check_branch
      %245 = sbr.rel (0) target = $region41
    $region40: #{tpu_custom_call.1} parent=1 // pred_region
      %247 = dma.done [#allocation4], 32
    $region41: #{tpu_custom_call.1} parent=1 // pred_fallthru
      _
    %248 = vsyncpa [#allocation3], 1
    %249 = vsyncpa [#allocation6], 1
    %250 = vsyncpa [#allocation4], 1

</llo_original>
